<compile_context>
chip_gen: v5e
topology: v5e:2x2
jax: 0.10.0
libtpu: 0.0.40
codegen_flags: <defaults>
</compile_context>

<pallas_src>
import jax
import jax.numpy as jnp
from jax.experimental import pallas as pl
from jax.experimental.pallas import tpu as pltpu


def _learnable_sigmoid_kernel(x_ref, slope_ref, o_ref):
    # x_ref:     (TILE_ROWS, F) VMEM tile
    # slope_ref: (1, F)         VMEM tile, resident, broadcasts over rows
    x = x_ref[...].astype(jnp.float32)
    slope = slope_ref[...].astype(jnp.float32)          # (1, F) broadcasts over rows
    y = 1.2 * jax.nn.sigmoid(slope * x)                 # elementwise (VPU + EUP)
    o_ref[...] = y.astype(o_ref.dtype)


def _pick_tile_rows(rows, F, itemsize, requested):
    """Largest multiple-of-8 row tile whose double-buffered in+out footprint
    stays inside a ~16 MiB VMEM budget (leaves plenty of headroom)."""
    if rows <= requested:
        return rows                                      # full-extent block is always legal
    f_padded = ((F + 127) // 128) * 128                  # lane padding
    bytes_per_row = f_padded * max(itemsize, 4)          # f32 compute copies
    budget = 16 * 1024 * 1024
    # in + out, each double-buffered  ->  4 tiles live at once
    max_rows = max(8, budget // (4 * bytes_per_row))
    tr = min(requested, max_rows, rows)
    tr = max(8, (tr // 8) * 8)                           # multiple of 8 (sublane)
    return tr


def learnable_sigmoid(x, slope, *, tile_rows=2048):
    """x: (..., F) float array, slope: (F,) float array."""
    orig_shape = x.shape
    F = orig_shape[-1]
    assert slope.shape == (F,)

    rows = 1
    for d in orig_shape[:-1]:
        rows *= d

    x2 = x.reshape(rows, F)
    slope2 = slope.reshape(1, F)

    tr = _pick_tile_rows(rows, F, jnp.dtype(x.dtype).itemsize, tile_rows)
    grid = (pl.cdiv(rows, tr),)

    # VMEM budget: double-buffered input tile + double-buffered output tile
    # (+ slope row + headroom), sized from the lane-padded tile footprint.
    f_padded = ((F + 127) // 128) * 128
    bytes_per_elem = max(jnp.dtype(x.dtype).itemsize, 4)
    tile_bytes = tr * f_padded * bytes_per_elem
    vmem_limit = min(64 * 1024 * 1024,
                     max(16 * 1024 * 1024, 4 * tile_bytes + 4 * 1024 * 1024))

    out = pl.pallas_call(
        _learnable_sigmoid_kernel,
        out_shape=jax.ShapeDtypeStruct((rows, F), x.dtype),
        grid=grid,
        in_specs=[
            pl.BlockSpec((tr, F), lambda i: (i, 0)),     # row tile of x
            pl.BlockSpec((1, F), lambda i: (0, 0)),      # slope row, stays resident
        ],
        out_specs=pl.BlockSpec((tr, F), lambda i: (i, 0)),
        compiler_params=pltpu.CompilerParams(
            dimension_semantics=("parallel",),
            vmem_limit_bytes=int(vmem_limit),
        ),
    )(x2, slope2)

    return out.reshape(orig_shape)


if __name__ == "__main__":
    key = jax.random.PRNGKey(0)

    # Shapes consistent with the module: feature dim F = in_features = 257.
    B, T, F = 2, 8, 257
    x = jax.random.normal(key, (B, T, F), dtype=jnp.float32)
    # Deterministic parameter init, same as nn.Parameter(torch.ones(in_features))
    slope = jnp.ones((F,), dtype=jnp.float32)

    y = learnable_sigmoid(x, slope)
    y = jax.block_until_ready(y)
    y_ref = 1.2 * jax.nn.sigmoid(slope * x)
    assert y.shape == x.shape
    assert jnp.allclose(y, y_ref, atol=1e-5, rtol=1e-5)

    # Exercise the tiled path with a partial last row-block (rows=39, tile=16).
    x2 = jax.random.normal(jax.random.PRNGKey(1), (3, 13, F), dtype=jnp.float32)
    slope2 = jax.random.normal(jax.random.PRNGKey(2), (F,), dtype=jnp.float32)
    y2 = learnable_sigmoid(x2, slope2, tile_rows=16)
    y2 = jax.block_until_ready(y2)
    y2_ref = 1.2 * jax.nn.sigmoid(slope2 * x2)
    assert jnp.allclose(y2, y2_ref, atol=1e-5, rtol=1e-5)

    # Exercise the adaptive large-tile path (rows > default tile).
    x3 = jax.random.normal(jax.random.PRNGKey(3), (32, 128, F), dtype=jnp.float32)
    slope3 = jax.random.normal(jax.random.PRNGKey(4), (F,), dtype=jnp.float32)
    y3 = learnable_sigmoid(x3, slope3)
    y3 = jax.block_until_ready(y3)
    y3_ref = 1.2 * jax.nn.sigmoid(slope3 * x3)
    assert jnp.allclose(y3, y3_ref, atol=1e-5, rtol=1e-5)

    print("KERNEL_OK")
</pallas_src>

<mosaic_0001>
module attributes {stable_mosaic.version = 11 : i64} {
  func.func @_learnable_sigmoid_kernel(%arg0: i32, %arg1: memref<16x257xf32, #tpu.memory_space<vmem>>, %arg2: memref<1x257xf32, #tpu.memory_space<vmem>>, %arg3: memref<16x257xf32, #tpu.memory_space<vmem>>) attributes {dimension_semantics = [#tpu.dimension_semantics<parallel>], iteration_bounds = array<i64: 1>, scalar_prefetch = 0 : i64, scratch_operands = 0 : i64, tpu.core_type = #tpu.core_type<tc>, window_params = [{transform_indices = @transform_0, window_bounds = array<i64: 16, 257>}, {pipeline_mode = #tpu.pipeline_mode<synchronous>, transform_indices = @transform_1, window_bounds = array<i64: 1, 257>}, {transform_indices = @transform_2, window_bounds = array<i64: 16, 257>}]} {
    %c0 = arith.constant 0 : index
    %c0_0 = arith.constant 0 : index
    %0 = vector.load %arg1[%c0, %c0_0] : memref<16x257xf32, #tpu.memory_space<vmem>>, vector<16x257xf32>
    %c0_1 = arith.constant 0 : index
    %c0_2 = arith.constant 0 : index
    %1 = vector.load %arg2[%c0_1, %c0_2] : memref<1x257xf32, #tpu.memory_space<vmem>>, vector<1x257xf32>
    %2 = vector.broadcast %1 : vector<1x257xf32> to vector<16x257xf32>
    %3 = arith.mulf %2, %0 : vector<16x257xf32>
    %4 = arith.negf %3 : vector<16x257xf32>
    %5 = math.exp %4 : vector<16x257xf32>
    %cst = arith.constant 1.000000e+00 : f32
    %6 = vector.broadcast %cst : f32 to vector<16x257xf32>
    %7 = arith.addf %6, %5 : vector<16x257xf32>
    %8 = arith.divf %6, %7 : vector<16x257xf32>
    %cst_3 = arith.constant 1.200000e+00 : f32
    %9 = vector.broadcast %cst_3 : f32 to vector<16x257xf32>
    %10 = arith.mulf %9, %8 : vector<16x257xf32>
    %c0_4 = arith.constant 0 : index
    %c0_5 = arith.constant 0 : index
    %11 = vector.load %arg3[%c0_4, %c0_5] : memref<16x257xf32, #tpu.memory_space<vmem>>, vector<16x257xf32>
    tpu.vector_store %arg3[%c0_4, %c0_5], %10 {strides = array<i32>} : memref<16x257xf32, #tpu.memory_space<vmem>>, vector<16x257xf32>,
    return
  }
  func.func @transform_0(%arg0: i32) -> (i32, i32) {
    %c0_i32 = arith.constant 0 : i32
    %c0_i32_0 = arith.constant 0 : i32
    return %arg0, %c0_i32 : i32, i32
  }
  func.func @transform_1(%arg0: i32) -> (i32, i32) {
    %c0_i32 = arith.constant 0 : i32
    %c0_i32_0 = arith.constant 0 : i32
    %c0_i32_1 = arith.constant 0 : i32
    return %c0_i32, %c0_i32_0 : i32, i32
  }
  func.func @transform_2(%arg0: i32) -> (i32, i32) {
    %c0_i32 = arith.constant 0 : i32
    %c0_i32_0 = arith.constant 0 : i32
    return %arg0, %c0_i32 : i32, i32
  }
}

</mosaic_0001>

<llo_original>
// kernel: tpu_custom_call.1
$region0: #{tpu_custom_call.1}
  #allocation0 [shape = 'u32[]', space=smem, size = 0x4, offset = 0x4, fixed_abs, tag = 'smem constant byte address 0x4 - core index']
  #allocation1 [shape = 'u32[72,128]{1,0:T(1,128)}', space=vmem, size = 0x9000, scoped, tag = 'internal scratch']
  %s0 = inlined_call_operand.hbm [shape: f32[16,257], index: 0, kind: input, shape index: {}]
  %s1 = inlined_call_operand.hbm [shape: f32[1,257], index: 1, kind: input, shape index: {}]
  %s2 = inlined_call_operand.hbm [shape: f32[16,257], index: 2, kind: output, shape index: {}]
  %s3 = sld [smem:[#allocation0]]
  $region26: #{tpu_custom_call.1} parent=0
    _
  %s5 = ssub.s32 1, %s3
  %s6 = scalar_select 0, %s5, %s3
  $region1: #{tpu_custom_call.1} parent=0
    #allocation2 [shape = 'u8[24576]{0}', space=vmem, size = 0x6000, scoped, tag = 'input window, operand 0, single buffered']
    #allocation3 [shape = 's32[1]{0}', space=sflag, size = 0x4, scoped, tag = 'scoped memory for tpu_custom_call.1']
    #allocation4 [shape = 's32[1]{0}', space=sflag, size = 0x4, scoped, tag = 'scoped memory for tpu_custom_call.1']
    #allocation5 [shape = 'u8[1536]{0}', space=vmem, size = 0x800, scoped, tag = 'input window, operand 1, single buffered']
    #allocation6 [shape = 's32[1]{0}', space=sflag, size = 0x4, scoped, tag = 'scoped memory for tpu_custom_call.1']
    #allocation7 [shape = 'u8[24576]{0}', space=vmem, size = 0x6000, scoped, tag = 'output window, operand 0, single buffered']
    %7 = vsyncpa [#allocation3], 0
    %8 = vsyncpa [#allocation6], 0
    %9 = vsyncpa [#allocation4], 0
    // Predicated region
    $region2: #{tpu_custom_call.1} parent=1 // pred_check
      _
    $region3: #{tpu_custom_call.1} parent=1 // pred_check_branch
      %11 = sbr.rel (0) target = $region5
    $region4: #{tpu_custom_call.1} parent=1 // pred_region
      %13 = vsyncadd [#allocation3], 0
      %s14 = sshll.u32 %s0, 4
      %s15 = int_to_ptr.hbm [resolvable:$true] %s14
      %s16 = sshll.u32 [#allocation2], 4
      %s17 = int_to_ptr.vmem [resolvable:$true] %s16
      %22 = dma.hbm_to_vmem [thread:$0]  %s15, 768, %s17, [#allocation3], 384, 384, 24
    $region5: #{tpu_custom_call.1} parent=1 // pred_fallthru
      _
    // Predicated region
    $region6: #{tpu_custom_call.1} parent=1 // pred_check
      _
    $region7: #{tpu_custom_call.1} parent=1 // pred_check_branch
      %24 = sbr.rel (0) target = $region9
    $region8: #{tpu_custom_call.1} parent=1 // pred_region
      %26 = vsyncadd [#allocation6], 0
      %s28 = sshll.u32 %s1, 4
      %s29 = int_to_ptr.hbm [resolvable:$true] %s28
      %s30 = sshll.u32 [#allocation5], 4
      %s31 = int_to_ptr.vmem [resolvable:$true] %s30
      %33 = dma.hbm_to_vmem [thread:$0]  %s29, 48, %s31, [#allocation6]
    $region9: #{tpu_custom_call.1} parent=1 // pred_fallthru
      _
    // Predicated region
    $region10: #{tpu_custom_call.1} parent=1 // pred_check
      _
    $region11: #{tpu_custom_call.1} parent=1 // pred_check_branch
      %35 = sbr.rel (0) target = $region13
    $region12: #{tpu_custom_call.1} parent=1 // pred_region
      %37 = dma.done [#allocation3], 768
    $region13: #{tpu_custom_call.1} parent=1 // pred_fallthru
      _
    // Predicated region
    $region14: #{tpu_custom_call.1} parent=1 // pred_check
      _
    $region15: #{tpu_custom_call.1} parent=1 // pred_check_branch
      %39 = sbr.rel (0) target = $region17
    $region16: #{tpu_custom_call.1} parent=1 // pred_region
      %41 = dma.done [#allocation6], 48
    $region17: #{tpu_custom_call.1} parent=1 // pred_fallthru
      _
    %v42 = vld [vmem:[#allocation2] sm:$0xff]
    %v43 = vld [vmem:[#allocation2 + $0x8] sm:$0xff]
    %v44 = vld [vmem:[#allocation2 + $0x10] sm:$0xff]
    %v45 = vld [vmem:[#allocation2 + $0x18] sm:$0xff]
    %v46 = vld [vmem:[#allocation2 + $0x20] sm:$0xff]
    %v47 = vld [vmem:[#allocation2 + $0x28] sm:$0xff]
    %v48 = vld [vmem:[#allocation5] sm:$0x7]
    %v50 = vperm.slane %v48, 0
    %v51 = vperm.slane %v48, 1
    %v52 = vperm.slane %v48, 2
    %v56 = vmul.f32 %v50, %v42
    %v57 = vmul.f32 %v51, %v43
    %v58 = vmul.f32 %v52, %v44
    %v59 = vmul.f32 %v50, %v45
    %v60 = vmul.f32 %v51, %v46
    %v61 = vmul.f32 %v52, %v47
    %v62 = vxor.u32 %v56, 2147483648
    %v63 = vxor.u32 %v57, 2147483648
    %v64 = vxor.u32 %v58, 2147483648
    %v65 = vxor.u32 %v59, 2147483648
    %v66 = vxor.u32 %v60, 2147483648
    %v67 = vxor.u32 %v61, 2147483648
    %v68 = vmul.f32 %v62, 1.442695
    %v69 = vpow.pop %v68
    %v70 = vmul.f32 %v63, 1.442695
    %v71 = vpow.pop %v70
    %v72 = vmul.f32 %v64, 1.442695
    %v73 = vpow.pop %v72
    %v74 = vmul.f32 %v65, 1.442695
    %v75 = vpow.pop %v74
    %v76 = vmul.f32 %v66, 1.442695
    %v77 = vpow.pop %v76
    %v78 = vmul.f32 %v67, 1.442695
    %v79 = vpow.pop %v78
    %v80 = vadd.f32 %v69, 1.0
    %v81 = vadd.f32 %v71, 1.0
    %v82 = vadd.f32 %v73, 1.0
    %v83 = vadd.f32 %v75, 1.0
    %v84 = vadd.f32 %v77, 1.0
    %v85 = vadd.f32 %v79, 1.0
    %v86 = vrcp.pop %v80
    %v87 = vmul.f32 %v80, %v86
    %v88 = vsub.f32 1.0, %v87
    %v89 = vmul.f32 %v86, %v88
    %v90 = vadd.f32 %v86, %v89
    %vm91 = vweird.f32 %v80
    %vm92 = vweird.f32 %v86
    %vm93 = vmor %vm91, %vm92
    %v94 = vsel %vm93, %v86, %v90
    %v95 = vand.u32 2147483647, %v80
    %vm96 = vcmp.eq.f32.partialorder %v95, 8.507059e+37
    %v97 = vand.u32 %v80, 2147483648
    %v98 = vor.u32 1.1754944e-38, %v97
    %v99 = vsel %vm96, %v98, %v94
    %v100 = vmul.f32 1.0, %v99
    %v101 = vrcp.pop %v81
    %v102 = vmul.f32 %v81, %v101
    %v103 = vsub.f32 1.0, %v102
    %v104 = vmul.f32 %v101, %v103
    %v105 = vadd.f32 %v101, %v104
    %vm106 = vweird.f32 %v81
    %vm107 = vweird.f32 %v101
    %vm108 = vmor %vm106, %vm107
    %v109 = vsel %vm108, %v101, %v105
    %v110 = vand.u32 2147483647, %v81
    %vm111 = vcmp.eq.f32.partialorder %v110, 8.507059e+37
    %v112 = vand.u32 %v81, 2147483648
    %v113 = vor.u32 1.1754944e-38, %v112
    %v114 = vsel %vm111, %v113, %v109
    %v115 = vmul.f32 1.0, %v114
    %v116 = vrcp.pop %v82
    %v117 = vmul.f32 %v82, %v116
    %v118 = vsub.f32 1.0, %v117
    %v119 = vmul.f32 %v116, %v118
    %v120 = vadd.f32 %v116, %v119
    %vm121 = vweird.f32 %v82
    %vm122 = vweird.f32 %v116
    %vm123 = vmor %vm121, %vm122
    %v124 = vsel %vm123, %v116, %v120
    %v125 = vand.u32 2147483647, %v82
    %vm126 = vcmp.eq.f32.partialorder %v125, 8.507059e+37
    %v127 = vand.u32 %v82, 2147483648
    %v128 = vor.u32 1.1754944e-38, %v127
    %v129 = vsel %vm126, %v128, %v124
    %v130 = vmul.f32 1.0, %v129
    %v131 = vrcp.pop %v83
    %v132 = vmul.f32 %v83, %v131
    %v133 = vsub.f32 1.0, %v132
    %v134 = vmul.f32 %v131, %v133
    %v135 = vadd.f32 %v131, %v134
    %vm136 = vweird.f32 %v83
    %vm137 = vweird.f32 %v131
    %vm138 = vmor %vm136, %vm137
    %v139 = vsel %vm138, %v131, %v135
    %v140 = vand.u32 2147483647, %v83
    %vm141 = vcmp.eq.f32.partialorder %v140, 8.507059e+37
    %v142 = vand.u32 %v83, 2147483648
    %v143 = vor.u32 1.1754944e-38, %v142
    %v144 = vsel %vm141, %v143, %v139
    %v145 = vmul.f32 1.0, %v144
    %v146 = vrcp.pop %v84
    %v147 = vmul.f32 %v84, %v146
    %v148 = vsub.f32 1.0, %v147
    %v149 = vmul.f32 %v146, %v148
    %v150 = vadd.f32 %v146, %v149
    %vm151 = vweird.f32 %v84
    %vm152 = vweird.f32 %v146
    %vm153 = vmor %vm151, %vm152
    %v154 = vsel %vm153, %v146, %v150
    %v155 = vand.u32 2147483647, %v84
    %vm156 = vcmp.eq.f32.partialorder %v155, 8.507059e+37
    %v157 = vand.u32 %v84, 2147483648
    %v158 = vor.u32 1.1754944e-38, %v157
    %v159 = vsel %vm156, %v158, %v154
    %v160 = vmul.f32 1.0, %v159
    %v161 = vrcp.pop %v85
    %v162 = vmul.f32 %v85, %v161
    %v163 = vsub.f32 1.0, %v162
    %v164 = vmul.f32 %v161, %v163
    %v165 = vadd.f32 %v161, %v164
    %vm166 = vweird.f32 %v85
    %vm167 = vweird.f32 %v161
    %vm168 = vmor %vm166, %vm167
    %v169 = vsel %vm168, %v161, %v165
    %v170 = vand.u32 2147483647, %v85
    %vm171 = vcmp.eq.f32.partialorder %v170, 8.507059e+37
    %v172 = vand.u32 %v85, 2147483648
    %v173 = vor.u32 1.1754944e-38, %v172
    %v174 = vsel %vm171, %v173, %v169
    %v175 = vmul.f32 1.0, %v174
    %v176 = vmul.f32 %v100, 1.2
    %v177 = vmul.f32 %v115, 1.2
    %v178 = vmul.f32 %v130, 1.2
    %v179 = vmul.f32 %v145, 1.2
    %v180 = vmul.f32 %v160, 1.2
    %v181 = vmul.f32 %v175, 1.2
    %182 = vst [vmem:[#allocation7] sm:$0xff] %v176
    %183 = vst [vmem:[#allocation7 + $0x8] sm:$0xff] %v177
    %vm184 = vcmask 7168
    %185 = vst.msk [vmem:[#allocation7 + $0x10] sm:$0xff] %vm184, %v178
    %186 = vst [vmem:[#allocation7 + $0x18] sm:$0xff] %v179
    %187 = vst [vmem:[#allocation7 + $0x20] sm:$0xff] %v180
    %188 = vst.msk [vmem:[#allocation7 + $0x28] sm:$0xff] %vm184, %v181
    // Predicated region
    $region18: #{tpu_custom_call.1} parent=1 // pred_check
      _
    $region19: #{tpu_custom_call.1} parent=1 // pred_check_branch
      %190 = sbr.rel (0) target = $region21
    $region20: #{tpu_custom_call.1} parent=1 // pred_region
      %192 = vsyncadd [#allocation4], 0
      %s193 = sshll.u32 [#allocation7], 4
      %s194 = int_to_ptr.vmem [resolvable:$true] %s193
      %s195 = sshll.u32 %s2, 4
      %s196 = int_to_ptr.hbm [resolvable:$true] %s195
      %201 = dma.vmem_to_hbm [thread:$0]  %s194, 768, %s196, [#allocation4], 384, 384, 24
    $region21: #{tpu_custom_call.1} parent=1 // pred_fallthru
      _
    // Predicated region
    $region22: #{tpu_custom_call.1} parent=1 // pred_check
      _
    $region23: #{tpu_custom_call.1} parent=1 // pred_check_branch
      %203 = sbr.rel (0) target = $region25
    $region24: #{tpu_custom_call.1} parent=1 // pred_region
      %205 = dma.done [#allocation4], 768
    $region25: #{tpu_custom_call.1} parent=1 // pred_fallthru
      _
    %206 = vsyncpa [#allocation3], 1
    %207 = vsyncpa [#allocation6], 1
    %208 = vsyncpa [#allocation4], 1

</llo_original>
